<compile_context>
chip_gen: v6e
topology: v6e:2x2x1
jax: 0.10.0
libtpu: 0.0.40
codegen_flags: <defaults>
</compile_context>

<pallas_src>
import functools

import jax
import jax.numpy as jnp
from jax.experimental import pallas as pl
from jax.experimental.pallas import tpu as pltpu


def _round_up(x, n):
    return ((x + n - 1) // n) * n


def _physical_vmem_bytes():
    try:
        return int(pltpu.get_tpu_info().vmem_capacity_bytes)
    except Exception:
        return 64 * 1024 * 1024  # conservative fallback (v7x per-TC VMEM)


def _vmem_bytes(tm, th, dp, cbytes, obytes):
    return (2 * tm * dp * cbytes            # x tile (double-buffered)
            + 2 * 2 * dp * th * cbytes      # W1 + W2 chunks (double-buffered)
            + 2 * 2 * (th + dp) * 4         # f32 bias chunks (double-buffered)
            + 2 * tm * dp * obytes          # output tile (double-buffered)
            + tm * dp * 4                   # f32 accumulator scratch
            + 2 * tm * th * 4)              # f32 GELU intermediate + temporaries


def _ffn_kernel(x_ref, w1_ref, b1_ref, w2_ref, b2_ref, o_ref, acc_ref, *,
                gelu_approx):
    # x_ref:  (TM, DP)    w1_ref: (DP, TH)   b1_ref: (1, TH) [f32]
    # w2_ref: (TH, DP)    b2_ref: (1, DP) [f32]
    # o_ref:  (TM, DP)    acc_ref: (TM, DP)  [f32 scratch]
    j = pl.program_id(1)

    # linear1 over this hidden chunk (MXU, f32 accumulation) + bias (f32).
    h = jnp.dot(x_ref[...], w1_ref[...], preferred_element_type=jnp.float32)
    h = h + b1_ref[...]

    if gelu_approx:
        # tanh GELU -> EUP (separate VLIW slot, effectively free).
        c = jnp.float32(0.7978845608028654)          # sqrt(2/pi)
        h = 0.5 * h * (1.0 + jnp.tanh(c * (h + 0.044715 * (h * h * h))))
    else:
        # exact erf GELU (torch.nn.GELU default) -> VALU polynomial.
        h = 0.5 * h * (1.0 + jax.lax.erf(h * jnp.float32(0.7071067811865476)))

    # dropout: eval-mode => identity.
    # TODO(synk): training-mode dropout would use pltpu.prng_seed + stateful_bernoulli.

    partial = jnp.dot(h.astype(w2_ref.dtype), w2_ref[...],
                      preferred_element_type=jnp.float32)

    @pl.when(j == 0)
    def _():
        # Fold b2 into the first partial: no zero-init sweep, no finalize add.
        acc_ref[...] = partial + b2_ref[...]

    @pl.when(j != 0)
    def _():
        acc_ref[...] += partial

    @pl.when(j == pl.num_programs(1) - 1)
    def _():
        o_ref[...] = acc_ref[...].astype(o_ref.dtype)


@functools.partial(jax.jit, static_argnames=("block_m", "block_h", "mxu_dtype",
                                             "gelu_approx"))
def positionwise_ffn(x, w1, b1, w2, b2, *, block_m=512, block_h=2048,
                     mxu_dtype="bfloat16", gelu_approx=False):
    """x: (..., d_model). Returns same shape, FFN applied over last axis.

    w1: (d_model, hidden), b1: (hidden,), w2: (hidden, d_model), b2: (d_model,)
    (weights transposed vs. torch.nn.Linear). `mxu_dtype` casts matmul
    operands (default bf16; pass None to keep the input dtype on the MXU).
    """
    orig_shape = x.shape
    out_dtype = x.dtype
    d_model = orig_shape[-1]
    hidden = w1.shape[1]

    x2d = x.reshape(-1, d_model)
    m = x2d.shape[0]

    compute_dtype = jnp.dtype(out_dtype if mxu_dtype is None else mxu_dtype)
    cbytes = compute_dtype.itemsize
    obytes = jnp.dtype(out_dtype).itemsize
    row_mult = {1: 32, 2: 16}.get(cbytes, 8)   # sublane-packing row multiple

    # --- tile geometry (lane-dense, (8,128)/MXU friendly) --------------------
    dp = _round_up(d_model, 128)                                   # padded d_model
    th = min(_round_up(block_h, 128), _round_up(hidden, 128))      # hidden tile
    tm = min(_round_up(block_m, row_mult), _round_up(m, row_mult))  # M tile
    # Give the "parallel" M axis >=2 tiles when possible (v7x: 2 TensorCores).
    if _round_up(m, row_mult) // tm < 2:
        half = _round_up(max(1, -(-m // 2)), row_mult)
        if half < tm:
            tm = half

    # --- VMEM cap with headroom (v7x: 64 MiB/TC; v5e/v6e: 128 MiB) -----------
    vmem_cap = max(32 * 1024 * 1024, _physical_vmem_bytes() - 12 * 1024 * 1024)
    while _vmem_bytes(tm, th, dp, cbytes, obytes) > vmem_cap and th > 128:
        th = max(128, th // 2)
    while _vmem_bytes(tm, th, dp, cbytes, obytes) > vmem_cap and tm > row_mult:
        new_tm = max(row_mult, _round_up(tm // 2, row_mult))
        if new_tm == tm:
            break
        tm = new_tm

    m_pad = _round_up(m, tm)
    h_pad = _round_up(hidden, th)

    # --- operands: skip padding copies when already tile-aligned -------------
    def _prep(a, rows, cols, dtype):
        if a.shape == (rows, cols):
            return a if a.dtype == dtype else a.astype(dtype)
        return jnp.zeros((rows, cols), dtype).at[:a.shape[0], :a.shape[1]].set(
            a.astype(dtype))

    x_p = _prep(x2d, m_pad, dp, compute_dtype)
    w1_p = _prep(w1, dp, h_pad, compute_dtype)
    w2_p = _prep(w2, h_pad, dp, compute_dtype)
    b1_p = _prep(b1.reshape(1, -1), 1, h_pad, jnp.float32)
    b2_p = _prep(b2.reshape(1, -1), 1, dp, jnp.float32)

    grid = (m_pad // tm, h_pad // th)

    vmem_needed = _vmem_bytes(tm, th, dp, cbytes, obytes)
    vmem_limit = int(min(vmem_cap, max(32 * 1024 * 1024, 2 * vmem_needed)))

    cost = pl.CostEstimate(
        flops=4 * m * d_model * hidden,                    # two matmuls
        transcendentals=m * hidden,                        # erf / tanh
        bytes_accessed=int(
            m_pad * dp * (cbytes + obytes)                 # x read + out write
            + grid[0] * 2 * dp * h_pad * cbytes            # W1+W2 re-read per M tile
            + grid[0] * (h_pad + dp) * 4),                 # biases
    )

    out = pl.pallas_call(
        functools.partial(_ffn_kernel, gelu_approx=gelu_approx),
        out_shape=jax.ShapeDtypeStruct((m_pad, dp), out_dtype),
        grid_spec=pltpu.PrefetchScalarGridSpec(
            num_scalar_prefetch=0,
            grid=grid,
            in_specs=[
                pl.BlockSpec((tm, dp), lambda i, j: (i, 0)),   # x tile
                pl.BlockSpec((dp, th), lambda i, j: (0, j)),   # W1 chunk
                pl.BlockSpec((1, th), lambda i, j: (0, j)),    # b1 chunk
                pl.BlockSpec((th, dp), lambda i, j: (j, 0)),   # W2 chunk
                pl.BlockSpec((1, dp), lambda i, j: (0, 0)),    # b2
            ],
            out_specs=pl.BlockSpec((tm, dp), lambda i, j: (i, 0)),
            scratch_shapes=[pltpu.VMEM((tm, dp), jnp.float32)],
        ),
        compiler_params=pltpu.CompilerParams(
            dimension_semantics=("parallel", "arbitrary"),
            vmem_limit_bytes=vmem_limit,
        ),
        cost_estimate=cost,
    )(x_p, w1_p, b1_p, w2_p, b2_p)

    return out[:m, :d_model].reshape(orig_shape)


def _reference(x, w1, b1, w2, b2, gelu_approx=False):
    h = x @ w1 + b1
    if gelu_approx:
        c = 0.7978845608028654
        h = 0.5 * h * (1.0 + jnp.tanh(c * (h + 0.044715 * h ** 3)))
    else:
        h = 0.5 * h * (1.0 + jax.lax.erf(h / jnp.sqrt(2.0)))
    return h @ w2 + b2


if __name__ == "__main__":
    def run_case(batch, seq, d_model, hidden, *, block_m=512, block_h=2048,
                 mxu_dtype="bfloat16", gelu_approx=False, atol=5e-2, rtol=5e-2):
        key = jax.random.PRNGKey(0)
        kx, kw1, kb1, kw2, kb2 = jax.random.split(key, 5)

        x = jax.random.normal(kx, (batch, seq, d_model), dtype=jnp.float32)
        # PyTorch nn.Linear weights are (out, in); stored transposed here.
        w1 = jax.random.normal(kw1, (d_model, hidden), dtype=jnp.float32) * 0.1
        b1 = jax.random.normal(kb1, (hidden,), dtype=jnp.float32) * 0.1
        w2 = jax.random.normal(kw2, (hidden, d_model), dtype=jnp.float32) * 0.1
        b2 = jax.random.normal(kb2, (d_model,), dtype=jnp.float32) * 0.1

        out = positionwise_ffn(x, w1, b1, w2, b2, block_m=block_m,
                               block_h=block_h, mxu_dtype=mxu_dtype,
                               gelu_approx=gelu_approx)
        out = jax.block_until_ready(out)

        ref = _reference(x.reshape(-1, d_model), w1, b1, w2, b2,
                         gelu_approx=gelu_approx).reshape(x.shape)
        assert out.shape == x.shape
        assert jnp.allclose(out, ref, atol=atol, rtol=rtol), (
            f"mismatch vs reference (d_model={d_model}, hidden={hidden}, "
            f"mxu_dtype={mxu_dtype}, gelu_approx={gelu_approx})")

    # 1) toy unaligned shape (exercises the zero-padding path), exact f32 MXU.
    run_case(batch=2, seq=8, d_model=16, hidden=32,
             mxu_dtype=None, atol=1e-5, rtol=1e-5)

    # 2) 128-aligned shape with tiny tiles -> multi-step grid on BOTH axes
    #    (exercises the hidden-axis accumulator + M pipelining), f32 MXU.
    run_case(batch=2, seq=8, d_model=128, hidden=256,
             block_m=8, block_h=128, mxu_dtype=None, atol=1e-4, rtol=1e-4)

    # 3) same shape with default bf16 MXU operands + default big tiles.
    run_case(batch=2, seq=8, d_model=128, hidden=256,
             atol=5e-2, rtol=5e-2)

    # 4) tanh-GELU fast path (EUP) vs matching tanh reference, bf16 MXU.
    run_case(batch=2, seq=8, d_model=128, hidden=256,
             gelu_approx=True, atol=5e-2, rtol=5e-2)

    print("KERNEL_OK")
</pallas_src>

<mosaic_0001>
module attributes {stable_mosaic.version = 11 : i64} {
  func.func @_ffn_kernel(%arg0: i32, %arg1: i32, %arg2: memref<8x128xf32, #tpu.memory_space<vmem>>, %arg3: memref<128x128xf32, #tpu.memory_space<vmem>>, %arg4: memref<1x128xf32, #tpu.memory_space<vmem>>, %arg5: memref<128x128xf32, #tpu.memory_space<vmem>>, %arg6: memref<1x128xf32, #tpu.memory_space<vmem>>, %arg7: memref<8x128xf32, #tpu.memory_space<vmem>>, %arg8: memref<8x128xf32, #tpu.memory_space<vmem>>) attributes {dimension_semantics = [#tpu.dimension_semantics<parallel>, #tpu.dimension_semantics<arbitrary>], iteration_bounds = array<i64: 2, 1>, scalar_prefetch = 0 : i64, scratch_operands = 1 : i64, tpu.core_type = #tpu.core_type<tc>, window_params = [{transform_indices = @transform_0, window_bounds = array<i64: 8, 128>}, {transform_indices = @transform_1, window_bounds = array<i64: 128, 128>}, {transform_indices = @transform_2, window_bounds = array<i64: 1, 128>}, {transform_indices = @transform_3, window_bounds = array<i64: 128, 128>}, {pipeline_mode = #tpu.pipeline_mode<synchronous>, transform_indices = @transform_4, window_bounds = array<i64: 1, 128>}, {transform_indices = @transform_5, window_bounds = array<i64: 8, 128>}]} {
    %c0 = arith.constant 0 : index
    %c0_0 = arith.constant 0 : index
    %0 = vector.load %arg2[%c0, %c0_0] : memref<8x128xf32, #tpu.memory_space<vmem>>, vector<8x128xf32>
    %c0_1 = arith.constant 0 : index
    %c0_2 = arith.constant 0 : index
    %1 = vector.load %arg3[%c0_1, %c0_2] : memref<128x128xf32, #tpu.memory_space<vmem>>, vector<128x128xf32>
    %cst = arith.constant dense<0.000000e+00> : vector<8x128xf32>
    %2 = tpu.matmul %0, %1, %cst {dimension_numbers = #tpu.dot_dimension_numbers<[1], [0], [0], [1], [0, 0, 1, 1], [], []>} : vector<8x128xf32>, vector<128x128xf32>, vector<8x128xf32> -> vector<8x128xf32>
    %c0_3 = arith.constant 0 : index
    %c0_4 = arith.constant 0 : index
    %3 = vector.load %arg4[%c0_3, %c0_4] : memref<1x128xf32, #tpu.memory_space<vmem>>, vector<1x128xf32>
    %4 = vector.broadcast %3 : vector<1x128xf32> to vector<8x128xf32>
    %5 = arith.addf %2, %4 : vector<8x128xf32>
    %cst_5 = arith.constant 5.000000e-01 : f32
    %6 = vector.broadcast %cst_5 : f32 to vector<8x128xf32>
    %7 = arith.mulf %6, %5 : vector<8x128xf32>
    %cst_6 = arith.constant 0.707106769 : f32
    %8 = vector.broadcast %cst_6 : f32 to vector<8x128xf32>
    %9 = arith.mulf %5, %8 : vector<8x128xf32>
    %10 = math.erf %9 : vector<8x128xf32>
    %cst_7 = arith.constant 1.000000e+00 : f32
    %11 = vector.broadcast %cst_7 : f32 to vector<8x128xf32>
    %12 = arith.addf %11, %10 : vector<8x128xf32>
    %13 = arith.mulf %7, %12 : vector<8x128xf32>
    %c0_8 = arith.constant 0 : index
    %c0_9 = arith.constant 0 : index
    %14 = vector.load %arg5[%c0_8, %c0_9] : memref<128x128xf32, #tpu.memory_space<vmem>>, vector<128x128xf32>
    %cst_10 = arith.constant dense<0.000000e+00> : vector<8x128xf32>
    %15 = tpu.matmul %13, %14, %cst_10 {dimension_numbers = #tpu.dot_dimension_numbers<[1], [0], [0], [1], [0, 0, 1, 1], [], []>} : vector<8x128xf32>, vector<128x128xf32>, vector<8x128xf32> -> vector<8x128xf32>
    %c0_i32 = arith.constant 0 : i32
    %16 = arith.cmpi eq, %arg1, %c0_i32 : i32
    %17 = arith.extui %16 : i1 to i32
    %c0_i32_11 = arith.constant 0 : i32
    %18 = arith.cmpi ne, %17, %c0_i32_11 : i32
    scf.if %18 {
      %c0_16 = arith.constant 0 : index
      %c0_17 = arith.constant 0 : index
      %25 = vector.load %arg6[%c0_16, %c0_17] : memref<1x128xf32, #tpu.memory_space<vmem>>, vector<1x128xf32>
      %26 = vector.broadcast %25 : vector<1x128xf32> to vector<8x128xf32>
      %27 = arith.addf %15, %26 : vector<8x128xf32>
      %c0_18 = arith.constant 0 : index
      %c0_19 = arith.constant 0 : index
      %28 = vector.load %arg8[%c0_18, %c0_19] : memref<8x128xf32, #tpu.memory_space<vmem>>, vector<8x128xf32>
      tpu.vector_store %arg8[%c0_18, %c0_19], %27 {strides = array<i32>} : memref<8x128xf32, #tpu.memory_space<vmem>>, vector<8x128xf32>,
    } else {
    }
    %c0_i32_12 = arith.constant 0 : i32
    %19 = arith.cmpi ne, %arg1, %c0_i32_12 : i32
    %20 = arith.extui %19 : i1 to i32
    %c0_i32_13 = arith.constant 0 : i32
    %21 = arith.cmpi ne, %20, %c0_i32_13 : i32
    scf.if %21 {
      %c0_16 = arith.constant 0 : index
      %c0_17 = arith.constant 0 : index
      %25 = vector.load %arg8[%c0_16, %c0_17] : memref<8x128xf32, #tpu.memory_space<vmem>>, vector<8x128xf32>
      %26 = arith.addf %25, %15 : vector<8x128xf32>
      %c0_18 = arith.constant 0 : index
      %c0_19 = arith.constant 0 : index
      %27 = vector.load %arg8[%c0_18, %c0_19] : memref<8x128xf32, #tpu.memory_space<vmem>>, vector<8x128xf32>
      tpu.vector_store %arg8[%c0_18, %c0_19], %26 {strides = array<i32>} : memref<8x128xf32, #tpu.memory_space<vmem>>, vector<8x128xf32>,
    } else {
    }
    %c0_i32_14 = arith.constant 0 : i32
    %22 = arith.cmpi eq, %arg1, %c0_i32_14 : i32
    %23 = arith.extui %22 : i1 to i32
    %c0_i32_15 = arith.constant 0 : i32
    %24 = arith.cmpi ne, %23, %c0_i32_15 : i32
    scf.if %24 {
      %c0_16 = arith.constant 0 : index
      %c0_17 = arith.constant 0 : index
      %25 = vector.load %arg8[%c0_16, %c0_17] : memref<8x128xf32, #tpu.memory_space<vmem>>, vector<8x128xf32>
      %c0_18 = arith.constant 0 : index
      %c0_19 = arith.constant 0 : index
      %26 = vector.load %arg7[%c0_18, %c0_19] : memref<8x128xf32, #tpu.memory_space<vmem>>, vector<8x128xf32>
      tpu.vector_store %arg7[%c0_18, %c0_19], %25 {strides = array<i32>} : memref<8x128xf32, #tpu.memory_space<vmem>>, vector<8x128xf32>,
    } else {
    }
    return
  }
  func.func @transform_0(%arg0: i32, %arg1: i32) -> (i32, i32) {
    %c0_i32 = arith.constant 0 : i32
    %c0_i32_0 = arith.constant 0 : i32
    return %arg0, %c0_i32 : i32, i32
  }
  func.func @transform_1(%arg0: i32, %arg1: i32) -> (i32, i32) {
    %c0_i32 = arith.constant 0 : i32
    %c0_i32_0 = arith.constant 0 : i32
    return %c0_i32, %arg1 : i32, i32
  }
  func.func @transform_2(%arg0: i32, %arg1: i32) -> (i32, i32) {
    %c0_i32 = arith.constant 0 : i32
    %c0_i32_0 = arith.constant 0 : i32
    return %c0_i32, %arg1 : i32, i32
  }
  func.func @transform_3(%arg0: i32, %arg1: i32) -> (i32, i32) {
    %c0_i32 = arith.constant 0 : i32
    %c0_i32_0 = arith.constant 0 : i32
    return %arg1, %c0_i32 : i32, i32
  }
  func.func @transform_4(%arg0: i32, %arg1: i32) -> (i32, i32) {
    %c0_i32 = arith.constant 0 : i32
    %c0_i32_0 = arith.constant 0 : i32
    %c0_i32_1 = arith.constant 0 : i32
    return %c0_i32, %c0_i32_0 : i32, i32
  }
  func.func @transform_5(%arg0: i32, %arg1: i32) -> (i32, i32) {
    %c0_i32 = arith.constant 0 : i32
    %c0_i32_0 = arith.constant 0 : i32
    return %arg0, %c0_i32 : i32, i32
  }
}

</mosaic_0001>

<llo_original>
// kernel: positionwise_ffn.1
$region0: #{positionwise_ffn.1}
  #allocation0 [shape = 'u32[]', space=smem, size = 0x4, offset = 0x4, fixed_abs, tag = 'smem constant byte address 0x4 - core index']
  #allocation1 [shape = 'u32[144,128]{1,0:T(1,128)}', space=vmem, size = 0x12000, scoped, tag = 'internal scratch']
  #allocation2 [shape = 'f32[8,128]{1,0:T(8,128)}', space=vmem, size = 0x1000, scoped, tag = 'scratch operand']
  %s0 = inlined_call_operand.vmem [shape: f32[16,128], index: 0, kind: input, shape index: {}]
  %s1 = inlined_call_operand.vmem [shape: f32[128,128], index: 1, kind: input, shape index: {}]
  %s2 = inlined_call_operand.vmem [shape: f32[1,128], index: 2, kind: input, shape index: {}]
  %s3 = inlined_call_operand.vmem [shape: f32[128,128], index: 3, kind: input, shape index: {}]
  %s4 = inlined_call_operand.vmem [shape: f32[1,128], index: 4, kind: input, shape index: {}]
  %s5 = inlined_call_operand.vmem [shape: f32[16,128], index: 5, kind: output, shape index: {}]
  %s6 = sld [smem:[#allocation0]]
  $region65: #{positionwise_ffn.1} parent=0
    _
  %s8 = ssub.s32 1, %s6
  %s9 = scalar_select 0, %s8, %s6
  loop: start=0, step=1, limit=4
  $region2: #{positionwise_ffn.1} parent=0 // loop_pre_header
    _
  $region3: #{positionwise_ffn.1} parent=0 // loop_header
    %s11 = sphi 0, %s15
    %p12 = scmp.ge.s32.totalorder %s11, 4
    %s18 = sphi 0, %s30
    %s19 = sphi 0, %s26
    %s20 = sphi 0, %s18
    %s21 = sphi 0, %s19
    %s22 = sphi 0, %s20
    %s23 = sphi 0, %s21
    %s33 = sphi 0, %s35
    %s36 = sphi 0, %s33
    %s37 = sphi 0, %s36
    %s53 = sphi 0, %s37
    %s59 = sphi 0, %s61
    %s62 = sphi 0, %s59
    %s63 = sphi 0, %s62
    %s79 = sphi 0, %s63
    %s85 = sphi 0, %s87
    %s88 = sphi 0, %s85
    %s89 = sphi 0, %s88
    %s105 = sphi 0, %s89
    %s111 = sphi 0, %s113
    %s114 = sphi 0, %s111
    %s115 = sphi 0, %s114
    %s131 = sphi 0, %s115
    %s135 = sphi 0, %s135
    %s137 = sphi 0, %s135
    %s138 = sphi 0, %s137
    %s152 = sphi 0, %s138
    %s158 = sphi 0, %s160
    %s161 = sphi 0, %s158
    %s162 = sphi 0, %s161
    %s178 = sphi 0, %s162
  $region4: #{positionwise_ffn.1} parent=0 // loop_header_branch
    %14 = sbr.rel (%p12) target = $region8
  $region5: #{positionwise_ffn.1} parent=0 // loop_body
    %s16 = ssub.s32 %s11, 1
    %s17 = ssub.s32 %s11, 2
    %s24 = sadd.s32 1, %s19
    %p25 = scmp.ge.s32.totalorder %s24, 1
    %s26 = scalar_select %p25, 0, %s24
    %s27 = sadd.s32 1, %s18
    %s28 = scalar_select %p25, %s27, %s18
    %p29 = scmp.ge.s32.totalorder %s28, 2
    %s30 = scalar_select %p29, 0, %s28
    %s31 = ssub.s32 %s18, %s30
    %p32 = scmp.eq.s32.totalorder %s31, 0
    %s34 = sadd.s32 %s33, 1
    %s35 = scalar_select %p32, %s33, %s34
    %p38 = pneg %p32
    %p39 = scmp.eq.s32.totalorder %s11, 1
    %p40 = por %p38, %p39
    %p41 = scmp.ne.s32.totalorder %s33, %s36
    %p42 = scmp.eq.s32.totalorder %s11, 0
    %p43 = por %p41, %p42
    %p44 = scmp.ne.s32.totalorder %s33, %s36
    %p45 = scmp.eq.s32.totalorder %s16, 1
    %p46 = por %p44, %p45
    %p47 = scmp.ne.s32.totalorder %s36, %s37
    %p48 = scmp.eq.s32.totalorder %s16, 0
    %p49 = por %p47, %p48
    %p50 = scmp.ne.s32.totalorder %s36, %s37
    %p51 = scmp.eq.s32.totalorder %s17, 1
    %p52 = por %p50, %p51
    %p54 = scmp.ne.s32.totalorder %s37, %s53
    %p55 = scmp.eq.s32.totalorder %s17, 0
    %p56 = por %p54, %p55
    %s57 = ssub.s32 %s19, %s26
    %p58 = scmp.eq.s32.totalorder %s57, 0
    %s60 = sadd.s32 %s59, 1
    %s61 = scalar_select %p58, %s59, %s60
    %p64 = pneg %p58
    %p65 = scmp.eq.s32.totalorder %s11, 1
    %p66 = por %p64, %p65
    %p67 = scmp.ne.s32.totalorder %s59, %s62
    %p68 = scmp.eq.s32.totalorder %s11, 0
    %p69 = por %p67, %p68
    %p70 = scmp.ne.s32.totalorder %s59, %s62
    %p71 = scmp.eq.s32.totalorder %s16, 1
    %p72 = por %p70, %p71
    %p73 = scmp.ne.s32.totalorder %s62, %s63
    %p74 = scmp.eq.s32.totalorder %s16, 0
    %p75 = por %p73, %p74
    %p76 = scmp.ne.s32.totalorder %s62, %s63
    %p77 = scmp.eq.s32.totalorder %s17, 1
    %p78 = por %p76, %p77
    %p80 = scmp.ne.s32.totalorder %s63, %s79
    %p81 = scmp.eq.s32.totalorder %s17, 0
    %p82 = por %p80, %p81
    %s83 = ssub.s32 %s19, %s26
    %p84 = scmp.eq.s32.totalorder %s83, 0
    %s86 = sadd.s32 %s85, 1
    %s87 = scalar_select %p84, %s85, %s86
    %p90 = pneg %p84
    %p91 = scmp.eq.s32.totalorder %s11, 1
    %p92 = por %p90, %p91
    %p93 = scmp.ne.s32.totalorder %s85, %s88
    %p94 = scmp.eq.s32.totalorder %s11, 0
    %p95 = por %p93, %p94
    %p96 = scmp.ne.s32.totalorder %s85, %s88
    %p97 = scmp.eq.s32.totalorder %s16, 1
    %p98 = por %p96, %p97
    %p99 = scmp.ne.s32.totalorder %s88, %s89
    %p100 = scmp.eq.s32.totalorder %s16, 0
    %p101 = por %p99, %p100
    %p102 = scmp.ne.s32.totalorder %s88, %s89
    %p103 = scmp.eq.s32.totalorder %s17, 1
    %p104 = por %p102, %p103
    %p106 = scmp.ne.s32.totalorder %s89, %s105
    %p107 = scmp.eq.s32.totalorder %s17, 0
    %p108 = por %p106, %p107
    %s109 = ssub.s32 %s19, %s26
    %p110 = scmp.eq.s32.totalorder %s109, 0
    %s112 = sadd.s32 %s111, 1
    %s113 = scalar_select %p110, %s111, %s112
    %p116 = pneg %p110
    %p117 = scmp.eq.s32.totalorder %s11, 1
    %p118 = por %p116, %p117
    %p119 = scmp.ne.s32.totalorder %s111, %s114
    %p120 = scmp.eq.s32.totalorder %s11, 0
    %p121 = por %p119, %p120
    %p122 = scmp.ne.s32.totalorder %s111, %s114
    %p123 = scmp.eq.s32.totalorder %s16, 1
    %p124 = por %p122, %p123
    %p125 = scmp.ne.s32.totalorder %s114, %s115
    %p126 = scmp.eq.s32.totalorder %s16, 0
    %p127 = por %p125, %p126
    %p128 = scmp.ne.s32.totalorder %s114, %s115
    %p129 = scmp.eq.s32.totalorder %s17, 1
    %p130 = por %p128, %p129
    %p132 = scmp.ne.s32.totalorder %s115, %s131
    %p133 = scmp.eq.s32.totalorder %s17, 0
    %p134 = por %p132, %p133
    %s136 = sadd.s32 %s135, 1
    %p139 = scmp.eq.s32.totalorder %s11, 1
    %p140 = scmp.ne.s32.totalorder %s135, %s137
    %p141 = scmp.eq.s32.totalorder %s11, 0
    %p142 = por %p140, %p141
    %p143 = scmp.ne.s32.totalorder %s135, %s137
    %p144 = scmp.eq.s32.totalorder %s16, 1
    %p145 = por %p143, %p144
    %p146 = scmp.ne.s32.totalorder %s137, %s138
    %p147 = scmp.eq.s32.totalorder %s16, 0
    %p148 = por %p146, %p147
    %p149 = scmp.ne.s32.totalorder %s137, %s138
    %p150 = scmp.eq.s32.totalorder %s17, 1
    %p151 = por %p149, %p150
    %p153 = scmp.ne.s32.totalorder %s138, %s152
    %p154 = scmp.eq.s32.totalorder %s17, 0
    %p155 = por %p153, %p154
    %s156 = ssub.s32 %s18, %s30
    %p157 = scmp.eq.s32.totalorder %s156, 0
    %s159 = sadd.s32 %s158, 1
    %s160 = scalar_select %p157, %s158, %s159
    %p163 = pneg %p157
    %p164 = scmp.eq.s32.totalorder %s11, 1
    %p165 = por %p163, %p164
    %p166 = scmp.ne.s32.totalorder %s158, %s161
    %p167 = scmp.eq.s32.totalorder %s11, 0
    %p168 = por %p166, %p167
    %p169 = scmp.ne.s32.totalorder %s158, %s161
    %p170 = scmp.eq.s32.totalorder %s16, 1
    %p171 = por %p169, %p170
    %p172 = scmp.ne.s32.totalorder %s161, %s162
    %p173 = scmp.eq.s32.totalorder %s16, 0
    %p174 = por %p172, %p173
    %p175 = scmp.ne.s32.totalorder %s161, %s162
    %p176 = scmp.eq.s32.totalorder %s17, 1
    %p177 = por %p175, %p176
    %p179 = scmp.ne.s32.totalorder %s162, %s178
    %p180 = scmp.eq.s32.totalorder %s17, 0
    %p181 = por %p179, %p180
    %p182 = scmp.le.s32.totalorder 1, %s11
    %p183 = scmp.lt.s32.totalorder %s11, 3
    %p184 = pnand %p182, %p183
    %p185 = pneg %p184
    // Predicated region
    $region9: #{positionwise_ffn.1} parent=5 // pred_check
      _
    $region10: #{positionwise_ffn.1} parent=5 // pred_check_branch
      %187 = sbr.rel (%p184) target = $region12
    $region11: #{positionwise_ffn.1} parent=5 // pred_region
      %s188 = ssub.s32 %s11, 1
      // Predicated region
      $region13: #{positionwise_ffn.1} parent=11 // pred_check
        %p189 = pneg %p75
      $region14: #{positionwise_ffn.1} parent=11 // pred_check_branch
        %191 = sbr.rel (%p189) target = $region16
      $region15: #{positionwise_ffn.1} parent=11 // pred_region
        %p192 = scmp.lt.s32.totalorder %s21, 0
        %s193 = scalar_select %p192, %s21, 0
        %s194 = smul.addr %s193, 8
        %s195 = scalar_lea.vmem %s1, %s194
      $region16: #{positionwise_ffn.1} parent=11 // pred_fallthru
        _
      // Predicated region
      $region17: #{positionwise_ffn.1} parent=11 // pred_check
        %p196 = pneg %p101
      $region18: #{positionwise_ffn.1} parent=11 // pred_check_branch
        %198 = sbr.rel (%p196) target = $region20
      $region19: #{positionwise_ffn.1} parent=11 // pred_region
        %p199 = scmp.lt.s32.totalorder %s21, 0
        %s200 = scalar_select %p199, %s21, 0
        %s201 = scalar_lea.vmem %s2, %s200
      $region20: #{positionwise_ffn.1} parent=11 // pred_fallthru
        _
      // Predicated region
      $region21: #{positionwise_ffn.1} parent=11 // pred_check
        %p202 = pneg %p127
      $region22: #{positionwise_ffn.1} parent=11 // pred_check_branch
        %204 = sbr.rel (%p202) target = $region24
      $region23: #{positionwise_ffn.1} parent=11 // pred_region
        %s205 = smul.u32 16, %s21
        %p206 = scmp.lt.s32.totalorder %s205, 15
        %s207 = scalar_select %p206, %s205, 15
        %s208 = smul.addr %s207, 8
        %s209 = scalar_lea.vmem %s3, %s208
        %s210 = smul.u32 16, %s21
      $region24: #{positionwise_ffn.1} parent=11 // pred_fallthru
        _
      // Predicated region
      $region25: #{positionwise_ffn.1} parent=11 // pred_check
        %p211 = pneg %p148
      $region26: #{positionwise_ffn.1} parent=11 // pred_check_branch
        %213 = sbr.rel (%p211) target = $region28
      $region27: #{positionwise_ffn.1} parent=11 // pred_region
        _
      $region28: #{positionwise_ffn.1} parent=11 // pred_fallthru
        _
    $region12: #{positionwise_ffn.1} parent=5 // pred_fallthru
      _
    %p214 = scmp.lt.s32.totalorder %s11, 2
    // Predicated region
    $region29: #{positionwise_ffn.1} parent=5 // pred_check
      %p215 = pneg %p214
    $region30: #{positionwise_ffn.1} parent=5 // pred_check_branch
      %217 = sbr.rel (%p215) target = $region32
    $region31: #{positionwise_ffn.1} parent=5 // pred_region
      // Predicated region
      $region33: #{positionwise_ffn.1} parent=31 // pred_check
        %p218 = pneg %p43
      $region34: #{positionwise_ffn.1} parent=31 // pred_check_branch
        %220 = sbr.rel (%p218) target = $region36
      $region35: #{positionwise_ffn.1} parent=31 // pred_region
        %p221 = scmp.lt.s32.totalorder %s18, 1
        %s222 = scalar_select %p221, %s18, 1
        %s223 = smul.addr %s222, 8
        %s224 = scalar_lea.vmem %s0, %s223
      $region36: #{positionwise_ffn.1} parent=31 // pred_fallthru
        _
    $region32: #{positionwise_ffn.1} parent=5 // pred_fallthru
      _
    %p225 = scmp.le.s32.totalorder 1, %s11
    %p226 = scmp.lt.s32.totalorder %s11, 3
    %p227 = pnand %p225, %p226
    %p228 = pneg %p227
    // Predicated region
    $region37: #{positionwise_ffn.1} parent=5 // pred_check
      _
    $region38: #{positionwise_ffn.1} parent=5 // pred_check_branch
      %230 = sbr.rel (%p227) target = $region40
    $region39: #{positionwise_ffn.1} parent=5 // pred_region
      %s231 = ssub.s32 %s11, 1
      %p232 = scmp.lt.s32.totalorder %s20, 1
      %s233 = scalar_select %p232, %s20, 1
      %s234 = smul.addr %s233, 8
      %s235 = scalar_lea.vmem %s0, %s234
      %p236 = pneg %p49
      %p237 = pneg %p46
      %p238 = scmp.lt.s32.totalorder %s21, 0
      %s239 = scalar_select %p238, %s21, 0
      %s240 = smul.addr %s239, 8
      %s241 = scalar_lea.vmem %s1, %s240
      %p242 = pneg %p75
      %p243 = pneg %p72
      %p244 = scmp.lt.s32.totalorder %s21, 0
      %s245 = scalar_select %p244, %s21, 0
      %s246 = scalar_lea.vmem %s2, %s245
      %p247 = pneg %p101
      %p248 = pneg %p98
      %s249 = smul.u32 16, %s21
      %p250 = scmp.lt.s32.totalorder %s249, 15
      %s251 = scalar_select %p250, %s249, 15
      %s252 = smul.addr %s251, 8
      %s253 = scalar_lea.vmem %s3, %s252
      %p254 = pneg %p127
      %p255 = pneg %p124
      %p256 = pneg %p148
      %p257 = pneg %p145
      %p258 = pneg %p174
      %p259 = pneg %p171
      %p260 = scmp.lt.s32.totalorder %s20, 1
      %s261 = scalar_select %p260, %s20, 1
      %s262 = smul.addr %s261, 8
      %s263 = scalar_lea.vmem %s5, %s262
      %p264 = scmp.lt.s32.totalorder %s20, 1
      %s265 = scalar_select %p264, %s20, 1
      %s266 = smul.addr %s265, 8
      %s267 = scalar_lea.vmem %s0, %s266
      %p268 = scmp.lt.s32.totalorder %s21, 0
      %s269 = scalar_select %p268, %s21, 0
      %s270 = smul.addr %s269, 8
      %s271 = scalar_lea.vmem %s1, %s270
      %p272 = scmp.lt.s32.totalorder %s21, 0
      %s273 = scalar_select %p272, %s21, 0
      %s274 = scalar_lea.vmem %s2, %s273
      %s275 = smul.u32 16, %s21
      %p276 = scmp.lt.s32.totalorder %s275, 15
      %s277 = scalar_select %p276, %s275, 15
      %s278 = smul.addr %s277, 8
      %s279 = scalar_lea.vmem %s3, %s278
      %s280 = smul.u32 16, %s21
      %p281 = scmp.lt.s32.totalorder %s20, 1
      %s282 = scalar_select %p281, %s20, 1
      %s283 = smul.addr %s282, 8
      %s284 = scalar_lea.vmem %s5, %s283
      %v285 = vld [vmem:[%s267] sm:$0xff]
      %v286 = vld [vmem:[%s271] sm:$0xff]
      %v287 = vld [vmem:[%s271 + $0x8] sm:$0xff]
      %v288 = vld [vmem:[%s271 + $0x10] sm:$0xff]
      %v289 = vld [vmem:[%s271 + $0x18] sm:$0xff]
      %v290 = vld [vmem:[%s271 + $0x20] sm:$0xff]
      %v291 = vld [vmem:[%s271 + $0x28] sm:$0xff]
      %v292 = vld [vmem:[%s271 + $0x30] sm:$0xff]
      %v293 = vld [vmem:[%s271 + $0x38] sm:$0xff]
      %v294 = vld [vmem:[%s271 + $0x40] sm:$0xff]
      %v295 = vld [vmem:[%s271 + $0x48] sm:$0xff]
      %v296 = vld [vmem:[%s271 + $0x50] sm:$0xff]
      %v297 = vld [vmem:[%s271 + $0x58] sm:$0xff]
      %v298 = vld [vmem:[%s271 + $0x60] sm:$0xff]
      %v299 = vld [vmem:[%s271 + $0x68] sm:$0xff]
      %v300 = vld [vmem:[%s271 + $0x70] sm:$0xff]
      %v301 = vld [vmem:[%s271 + $0x78] sm:$0xff]
      %v302 = vld [vmem:[%s274] sm:$0x1]
      %v304 = vlaneseq
      %v305 = vshrl.u32 %v304, 7
      %v306 = vsub.s32 0, %v305
      %v307 = vrot.slane %v302, %v306
      %309 = vmatprep.subr.mxu0 0.0
      %310 = vmatpush1.msra.mxu0 %v301
      %311 = vmatprep.subr.mxu0 0.0
      %312 = vmatpush1.msra.mxu0 %v300
      %313 = vmatprep.subr.mxu0 0.0
      %314 = vmatpush1.msra.mxu0 %v299
      %315 = vmatprep.subr.mxu0 0.0
      %316 = vmatpush1.msra.mxu0 %v298
      %317 = vmatprep.subr.mxu0 0.0
      %318 = vmatpush1.msra.mxu0 %v297
      %319 = vmatprep.subr.mxu0 0.0
      %320 = vmatpush1.msra.mxu0 %v296
      %321 = vmatprep.subr.mxu0 0.0
      %322 = vmatpush1.msra.mxu0 %v295
      %323 = vmatprep.subr.mxu0 0.0
      %324 = vmatpush1.msra.mxu0 %v294
      %325 = vmatprep.subr.mxu0 0.0
      %326 = vmatpush1.msra.mxu0 %v293
      %327 = vmatprep.subr.mxu0 0.0
      %328 = vmatpush1.msra.mxu0 %v292
      %329 = vmatprep.subr.mxu0 0.0
      %330 = vmatpush1.msra.mxu0 %v291
      %331 = vmatprep.subr.mxu0 0.0
      %332 = vmatpush1.msra.mxu0 %v290
      %333 = vmatprep.subr.mxu0 0.0
      %334 = vmatpush1.msra.mxu0 %v289
      %335 = vmatprep.subr.mxu0 0.0
      %336 = vmatpush1.msra.mxu0 %v288
      %337 = vmatprep.subr.mxu0 0.0
      %338 = vmatpush1.msra.mxu0 %v287
      %339 = vmatprep.subr.mxu0 0.0
      %340 = vmatpush1.msra.mxu0 %v286
      %341 = vmatprep.subr.mxu0 0.0
      %342 = vmatpush2.msra.mxu0 0.0
      %343 = vmatprep.subr.mxu0 0.0
      %344 = vmatpush2.msra.mxu0 0.0
      %345 = vmatprep.subr.mxu0 0.0
      %346 = vmatpush2.msra.mxu0 0.0
      %347 = vmatprep.subr.mxu0 0.0
      %348 = vmatpush2.msra.mxu0 0.0
      %349 = vmatprep.subr.mxu0 0.0
      %350 = vmatpush2.msra.mxu0 0.0
      %351 = vmatprep.subr.mxu0 0.0
      %352 = vmatpush2.msra.mxu0 0.0
      %353 = vmatprep.subr.mxu0 0.0
      %354 = vmatpush2.msra.mxu0 0.0
      %355 = vmatprep.subr.mxu0 0.0
      %356 = vmatpush2.msra.mxu0 0.0
      %357 = vmatprep.subr.mxu0 0.0
      %358 = vmatpush2.msra.mxu0 0.0
      %359 = vmatprep.subr.mxu0 0.0
      %360 = vmatpush2.msra.mxu0 0.0
      %361 = vmatprep.subr.mxu0 0.0
      %362 = vmatpush2.msra.mxu0 0.0
      %363 = vmatprep.subr.mxu0 0.0
      %364 = vmatpush2.msra.mxu0 0.0
      %365 = vmatprep.subr.mxu0 0.0
      %366 = vmatpush2.msra.mxu0 0.0
      %367 = vmatprep.subr.mxu0 0.0
      %368 = vmatpush2.msra.mxu0 0.0
      %369 = vmatprep.subr.mxu0 0.0
      %370 = vmatpush2.msra.mxu0 0.0
      %371 = vmatprep.subr.mxu0 0.0
      %372 = vmatpush2.msra.mxu0 0.0
      %373 = vmatprep.mubr.f32.mxu0 0.0
      %374 = vmatmul.mubr.f32.gmra.mxu0 %v285
      %v375 = vpop.f32.mrf.mxu0
      %v376 = vadd.f32 %v307, %v375
      %v377 = vpop.f32.mrf.mxu0
      %378 = vdwg.mxu0
      %v379 = vmul.f32 %v376, 0.5
      %v380 = vmul.f32 %v376, 0.70710677
      %v381 = verf.f32.pop %v380
      %v382 = vadd.f32 %v381, 1.0
      %v383 = vmul.f32 %v379, %v382
      %v384 = vld [vmem:[%s279] sm:$0xff]
      %v385 = vld [vmem:[%s279 + $0x8] sm:$0xff]
      %v386 = vld [vmem:[%s279 + $0x10] sm:$0xff]
      %v387 = vld [vmem:[%s279 + $0x18] sm:$0xff]
      %v388 = vld [vmem:[%s279 + $0x20] sm:$0xff]
      %v389 = vld [vmem:[%s279 + $0x28] sm:$0xff]
      %v390 = vld [vmem:[%s279 + $0x30] sm:$0xff]
      %v391 = vld [vmem:[%s279 + $0x38] sm:$0xff]
      %v392 = vld [vmem:[%s279 + $0x40] sm:$0xff]
      %v393 = vld [vmem:[%s279 + $0x48] sm:$0xff]
      %v394 = vld [vmem:[%s279 + $0x50] sm:$0xff]
      %v395 = vld [vmem:[%s279 + $0x58] sm:$0xff]
      %v396 = vld [vmem:[%s279 + $0x60] sm:$0xff]
      %v397 = vld [vmem:[%s279 + $0x68] sm:$0xff]
      %v398 = vld [vmem:[%s279 + $0x70] sm:$0xff]
      %v399 = vld [vmem:[%s279 + $0x78] sm:$0xff]
      %400 = vmatprep.subr.mxu0 0.0
      %401 = vmatpush1.msra.mxu0 %v399
      %402 = vmatprep.subr.mxu0 0.0
      %403 = vmatpush1.msra.mxu0 %v398
      %404 = vmatprep.subr.mxu0 0.0
      %405 = vmatpush1.msra.mxu0 %v397
      %406 = vmatprep.subr.mxu0 0.0
      %407 = vmatpush1.msra.mxu0 %v396
      %408 = vmatprep.subr.mxu0 0.0
      %409 = vmatpush1.msra.mxu0 %v395
      %410 = vmatprep.subr.mxu0 0.0
      %411 = vmatpush1.msra.mxu0 %v394
      %412 = vmatprep.subr.mxu0 0.0
      %413 = vmatpush1.msra.mxu0 %v393
      %414 = vmatprep.subr.mxu0 0.0
      %415 = vmatpush1.msra.mxu0 %v392
      %416 = vmatprep.subr.mxu0 0.0
      %417 = vmatpush1.msra.mxu0 %v391
      %418 = vmatprep.subr.mxu0 0.0
      %419 = vmatpush1.msra.mxu0 %v390
      %420 = vmatprep.subr.mxu0 0.0
      %421 = vmatpush1.msra.mxu0 %v389
      %422 = vmatprep.subr.mxu0 0.0
      %423 = vmatpush1.msra.mxu0 %v388
      %424 = vmatprep.subr.mxu0 0.0
      %425 = vmatpush1.msra.mxu0 %v387
      %426 = vmatprep.subr.mxu0 0.0
      %427 = vmatpush1.msra.mxu0 %v386
      %428 = vmatprep.subr.mxu0 0.0
      %429 = vmatpush1.msra.mxu0 %v385
      %430 = vmatprep.subr.mxu0 0.0
      %431 = vmatpush1.msra.mxu0 %v384
      %432 = vmatprep.subr.mxu0 0.0
      %433 = vmatpush2.msra.mxu0 0.0
      %434 = vmatprep.subr.mxu0 0.0
      %435 = vmatpush2.msra.mxu0 0.0
      %436 = vmatprep.subr.mxu0 0.0
      %437 = vmatpush2.msra.mxu0 0.0
      %438 = vmatprep.subr.mxu0 0.0
      %439 = vmatpush2.msra.mxu0 0.0
      %440 = vmatprep.subr.mxu0 0.0
      %441 = vmatpush2.msra.mxu0 0.0
      %442 = vmatprep.subr.mxu0 0.0
      %443 = vmatpush2.msra.mxu0 0.0
      %444 = vmatprep.subr.mxu0 0.0
      %445 = vmatpush2.msra.mxu0 0.0
      %446 = vmatprep.subr.mxu0 0.0
      %447 = vmatpush2.msra.mxu0 0.0
      %448 = vmatprep.subr.mxu0 0.0
      %449 = vmatpush2.msra.mxu0 0.0
      %450 = vmatprep.subr.mxu0 0.0
      %451 = vmatpush2.msra.mxu0 0.0
      %452 = vmatprep.subr.mxu0 0.0
      %453 = vmatpush2.msra.mxu0 0.0
      %454 = vmatprep.subr.mxu0 0.0
      %455 = vmatpush2.msra.mxu0 0.0
      %456 = vmatprep.subr.mxu0 0.0
      %457 = vmatpush2.msra.mxu0 0.0
      %458 = vmatprep.subr.mxu0 0.0
      %459 = vmatpush2.msra.mxu0 0.0
      %460 = vmatprep.subr.mxu0 0.0
      %461 = vmatpush2.msra.mxu0 0.0
      %462 = vmatprep.subr.mxu0 0.0
      %463 = vmatpush2.msra.mxu0 0.0
      %464 = vmatprep.mubr.f32.mxu0 0.0
      %465 = vmatmul.mubr.f32.gmra.mxu0 %v383
      %v466 = vpop.f32.mrf.mxu0
      %v467 = vadd.f32 0.0, %v466
      %v468 = vpop.f32.mrf.mxu0
      %469 = vdwg.mxu0
      %p470 = scmp.eq.s32.totalorder %s21, 0
      // Predicated region
      $region41: #{positionwise_ffn.1} parent=39 // pred_check
        %p471 = pneg %p470
      $region42: #{positionwise_ffn.1} parent=39 // pred_check_branch
        %473 = sbr.rel (%p471) target = $region44
      $region43: #{positionwise_ffn.1} parent=39 // pred_region
        %v474 = vld [vmem:[%s4] sm:$0x1]
        %v476 = vlaneseq
        %v477 = vshrl.u32 %v476, 7
        %v478 = vsub.s32 0, %v477
        %v479 = vrot.slane %v474, %v478
        %v481 = vadd.f32 %v467, %v479
        %482 = vst [vmem:[#allocation2] sm:$0xff] %v481
      $region44: #{positionwise_ffn.1} parent=39 // pred_fallthru
        _
      %p483 = scmp.ne.s32.totalorder %s21, 0
      // Predicated region
      $region45: #{positionwise_ffn.1} parent=39 // pred_check
        %p484 = pneg %p483
      $region46: #{positionwise_ffn.1} parent=39 // pred_check_branch
        %486 = sbr.rel (%p484) target = $region48
      $region47: #{positionwise_ffn.1} parent=39 // pred_region
        %v487 = vld [vmem:[#allocation2] sm:$0xff]
        %v488 = vadd.f32 %v487, %v467
        %489 = vst [vmem:[#allocation2] sm:$0xff] %v488
      $region48: #{positionwise_ffn.1} parent=39 // pred_fallthru
        _
      // Predicated region
      $region49: #{positionwise_ffn.1} parent=39 // pred_check
        %p490 = pneg %p470
      $region50: #{positionwise_ffn.1} parent=39 // pred_check_branch
        %492 = sbr.rel (%p490) target = $region52
      $region51: #{positionwise_ffn.1} parent=39 // pred_region
        %v493 = vld [vmem:[#allocation2] sm:$0xff]
        %494 = vst [vmem:[%s284] sm:$0xff] %v493
      $region52: #{positionwise_ffn.1} parent=39 // pred_fallthru
        _
      %p495 = scmp.lt.s32.totalorder %s20, 1
      %s496 = scalar_select %p495, %s20, 1
      %s497 = smul.addr %s496, 8
      %s498 = scalar_lea.vmem %s5, %s497
      // Predicated region
      $region53: #{positionwise_ffn.1} parent=39 // pred_check
        %p499 = pneg %p171
      $region54: #{positionwise_ffn.1} parent=39 // pred_check_branch
        %501 = sbr.rel (%p499) target = $region56
      $region55: #{positionwise_ffn.1} parent=39 // pred_region
        _
      $region56: #{positionwise_ffn.1} parent=39 // pred_fallthru
        _
    $region40: #{positionwise_ffn.1} parent=5 // pred_fallthru
      _
    %p502 = scmp.le.s32.totalorder 2, %s11
    // Predicated region
    $region57: #{positionwise_ffn.1} parent=5 // pred_check
      %p503 = pneg %p502
    $region58: #{positionwise_ffn.1} parent=5 // pred_check_branch
      %505 = sbr.rel (%p503) target = $region60
    $region59: #{positionwise_ffn.1} parent=5 // pred_region
      %s506 = ssub.s32 %s11, 2
      // Predicated region
      $region61: #{positionwise_ffn.1} parent=59 // pred_check
        %p507 = pneg %p177
      $region62: #{positionwise_ffn.1} parent=59 // pred_check_branch
        %509 = sbr.rel (%p507) target = $region64
      $region63: #{positionwise_ffn.1} parent=59 // pred_region
        %p510 = scmp.lt.s32.totalorder %s22, 1
        %s511 = scalar_select %p510, %s22, 1
        %s512 = smul.addr %s511, 8
        %s513 = scalar_lea.vmem %s5, %s512
      $region64: #{positionwise_ffn.1} parent=59 // pred_fallthru
        _
    $region60: #{positionwise_ffn.1} parent=5 // pred_fallthru
      _
  $region6: #{positionwise_ffn.1} parent=0 // loop_footer
    %s15 = sadd.s32 1, %s11
  $region7: #{positionwise_ffn.1} parent=0 // loop_footer_branch
    %10 = sbr.rel target = $region3
  $region8: #{positionwise_ffn.1} parent=0 // loop_exit
    _

</llo_original>
